<compile_context>
chip_gen: v7x
topology: tpu7x:2x2x1
jax: 0.10.0
libtpu: 0.0.40
codegen_flags: <defaults>
</compile_context>

<pallas_src>
import jax
import jax.numpy as jnp
from jax import lax
from jax.experimental import pallas as pl
from jax.experimental.pallas import tpu as pltpu

EPS = 1e-5  # nn.BatchNorm3d default eps


def _fused_transition_kernel(x_ref, scale_ref, shift_ref, pmat_ref, w_ref, b_ref,
                             o_ref, pooled_ref):
    # x_ref:        (D, H*W, Cin)     one sample, channels-last, H/W flattened
    # scale/shift:  (1, Cin)          folded eval-mode BatchNorm3d
    # pmat_ref:     (HoWo_p, H*W)     H+W window-sum + stride-2 + 1/27 pool matrix (pad rows zero)
    # w_ref:        (Cin, Cout)       1x1x1 conv weight as a matmul
    # b_ref:        (1, Cout)         conv bias
    # o_ref:        (Do*HoWo_p, Cout) dense output slab (pad rows = bias, dropped in wrapper)
    # pooled_ref:   (Do*HoWo_p, Cin)  f32 scratch for pooled (pre-conv) activations
    HoWo_p = pmat_ref.shape[0]
    Do = pooled_ref.shape[0] // HoWo_p

    scale = scale_ref[...]          # (1, Cin)  f32
    shift = shift_ref[...]          # (1, Cin)  f32
    pmat = pmat_ref[...]            # (HoWo_p, H*W) f32

    def od_body(od, carry):
        d0 = pl.multiple_of(2 * od, 2)
        slab = x_ref[pl.ds(d0, 3), :, :].astype(jnp.float32)       # (3, H*W, Cin)
        slab = jnp.maximum(slab * scale + shift, 0.0)              # BN + ReLU (once per elem per od)
        dsum = slab[0] + slab[1] + slab[2]                         # (H*W, Cin): D-window sum
        # H/W window sums + stride-2 downsample + 1/27, one matmul per od:
        r0 = pl.multiple_of(od * HoWo_p, 8)
        pooled_ref[pl.ds(r0, HoWo_p), :] = jnp.dot(
            pmat, dsum, preferred_element_type=jnp.float32)        # (HoWo_p, Cin)
        return carry

    lax.fori_loop(0, Do, od_body, 0)

    # Batched 1x1x1 conv AFTER pooling (linear op commutes with avg pool) + single dense store.
    out = jnp.dot(pooled_ref[...], w_ref[...],
                  preferred_element_type=jnp.float32) + b_ref[...]
    o_ref[...] = out.astype(o_ref.dtype)


def transition_block_3d(x_ncdhw, params):
    gamma = params["gamma"]
    beta = params["beta"]
    running_mean = params["running_mean"]
    running_var = params["running_var"]
    conv_w = params["conv_w"]   # (Cout, Cin, 1, 1, 1)
    conv_b = params["conv_b"]   # (Cout,)

    N, Cin, D, H, W = x_ncdhw.shape
    Cout = conv_w.shape[0]
    assert D >= 3 and H >= 3 and W >= 3, "AvgPool3d(kernel=3, stride=2, no pad) needs D,H,W >= 3"
    Do, Ho, Wo = (D - 3) // 2 + 1, (H - 3) // 2 + 1, (W - 3) // 2 + 1
    HW = H * W
    HoWo = Ho * Wo
    HoWo_p = ((HoWo + 7) // 8) * 8          # pad per-od output rows to full sublanes
    Mo_p = Do * HoWo_p

    # TODO(synk): training-mode BatchNorm (batch statistics + running-stat updates) is not
    # implemented; eval-mode running statistics are folded into scale/shift.
    inv_std = 1.0 / jnp.sqrt(running_var.astype(jnp.float32) + EPS)
    g32 = gamma.astype(jnp.float32)
    scale = (g32 * inv_std).reshape(1, Cin)
    shift = (beta.astype(jnp.float32)
             - running_mean.astype(jnp.float32) * g32 * inv_std).reshape(1, Cin)

    # 1x1x1 conv weight -> plain (Cin, Cout) matmul weight; bias as (1, Cout)
    w = conv_w.reshape(Cout, Cin).T.astype(jnp.float32)
    b = conv_b.reshape(1, Cout).astype(jnp.float32)

    # Pool matrix: pmat[oh*Wo+ow, h*W+w] = 1/27 iff h in [2oh, 2oh+2] and w in [2ow, 2ow+2];
    # rows >= Ho*Wo (sublane padding) are zero.
    row = jnp.arange(HoWo_p, dtype=jnp.int32)
    oh = row // Wo
    ow = row % Wo
    hh = jnp.arange(H, dtype=jnp.int32)
    ww = jnp.arange(W, dtype=jnp.int32)
    in_h = (hh[None, :] >= 2 * oh[:, None]) & (hh[None, :] <= 2 * oh[:, None] + 2)   # (HoWo_p, H)
    in_w = (ww[None, :] >= 2 * ow[:, None]) & (ww[None, :] <= 2 * ow[:, None] + 2)   # (HoWo_p, W)
    mask = in_h[:, :, None] & in_w[:, None, :] & (row < HoWo)[:, None, None]
    pmat = jnp.where(mask, jnp.float32(1.0 / 27.0), jnp.float32(0.0)).reshape(HoWo_p, HW)

    # NCDHW -> (N, D, H*W, Cin) channels-last (full-volume transpose; see NOTE at top).
    x = jnp.transpose(x_ncdhw, (0, 2, 3, 4, 1)).reshape(N, D, HW, Cin)

    # VMEM budget: double-buffered input/output blocks + scratch + broadcast params + temporaries.
    itemsize = jnp.dtype(x.dtype).itemsize
    vmem_est = (2 * D * HW * Cin * itemsize
                + 2 * Mo_p * Cout * itemsize
                + Mo_p * Cin * 4
                + 2 * (HoWo_p * HW + Cin * Cout + 2 * Cin + Cout) * 4
                + 6 * HW * Cin * 4)
    try:
        vmem_cap = int(pltpu.get_tpu_info().vmem_capacity_bytes)
    except Exception:
        vmem_cap = 64 * 1024 * 1024
    vmem_limit = int(min(max(4 * vmem_est, 32 * 1024 * 1024), (vmem_cap * 4) // 5))

    out2d = pl.pallas_call(
        _fused_transition_kernel,
        out_shape=jax.ShapeDtypeStruct((N, Mo_p, Cout), x_ncdhw.dtype),
        grid_spec=pltpu.PrefetchScalarGridSpec(
            num_scalar_prefetch=0,
            grid=(N,),
            in_specs=[
                pl.BlockSpec((None, D, HW, Cin), lambda n: (n, 0, 0, 0)),
                pl.BlockSpec((1, Cin), lambda n: (0, 0)),
                pl.BlockSpec((1, Cin), lambda n: (0, 0)),
                pl.BlockSpec((HoWo_p, HW), lambda n: (0, 0)),
                pl.BlockSpec((Cin, Cout), lambda n: (0, 0)),
                pl.BlockSpec((1, Cout), lambda n: (0, 0)),
            ],
            out_specs=pl.BlockSpec((None, Mo_p, Cout), lambda n: (n, 0, 0)),
            scratch_shapes=[pltpu.VMEM((Mo_p, Cin), jnp.float32)],
        ),
        compiler_params=pltpu.CompilerParams(
            dimension_semantics=("parallel",),
            vmem_limit_bytes=vmem_limit,
        ),
    )(x, scale, shift, pmat, w, b)

    # (N, Do*HoWo_p, Cout) -> drop sublane-pad rows -> (N, Cout, Do, Ho, Wo)
    out = out2d.reshape(N, Do, HoWo_p, Cout)[:, :, :HoWo, :]
    out = out.reshape(N, Do, Ho, Wo, Cout)
    return jnp.transpose(out, (0, 4, 1, 2, 3))


def _reference(x_ncdhw, params):
    gamma, beta = params["gamma"], params["beta"]
    mean, var = params["running_mean"], params["running_var"]
    w, b = params["conv_w"], params["conv_b"]
    xc = (x_ncdhw - mean[None, :, None, None, None]) * \
        (1.0 / jnp.sqrt(var + EPS))[None, :, None, None, None]
    y = gamma[None, :, None, None, None] * xc + beta[None, :, None, None, None]
    y = jnp.maximum(y, 0.0)
    y = jnp.einsum("ncdhw,oc->nodhw", y, w.reshape(w.shape[0], w.shape[1])) \
        + b[None, :, None, None, None]
    N, Co, D, H, W = y.shape
    Do, Ho, Wo = (D - 3) // 2 + 1, (H - 3) // 2 + 1, (W - 3) // 2 + 1
    acc = jnp.zeros((N, Co, Do, Ho, Wo), jnp.float32)
    for kd in range(3):
        for kh in range(3):
            for kw in range(3):
                acc = acc + y[:, :, kd:kd + 2 * Do:2,
                              kh:kh + 2 * Ho:2, kw:kw + 2 * Wo:2]
    return acc / 27.0


if __name__ == "__main__":
    key = jax.random.PRNGKey(0)
    k1, k2, k3, k4, k5, k6, k7 = jax.random.split(key, 7)

    N, Cin, Cout = 2, 8, 16
    D = H = W = 8   # -> pooled output 3x3x3

    params = {
        "gamma": jax.random.uniform(k1, (Cin,), minval=0.5, maxval=1.5),
        "beta": jax.random.normal(k2, (Cin,)) * 0.1,
        "running_mean": jax.random.normal(k3, (Cin,)) * 0.1,
        "running_var": jax.random.uniform(k4, (Cin,), minval=0.5, maxval=1.5),
        "conv_w": jax.random.normal(k5, (Cout, Cin, 1, 1, 1)) * 0.1,
        "conv_b": jax.random.normal(k6, (Cout,)) * 0.1,
    }
    x = jax.random.normal(k7, (N, Cin, D, H, W), dtype=jnp.float32)

    out = transition_block_3d(x, params)
    out = jax.block_until_ready(out)

    ref = _reference(x, params)
    assert out.shape == (N, Cout, 3, 3, 3), out.shape
    assert jnp.allclose(out, ref, rtol=1e-4, atol=1e-5), \
        float(jnp.max(jnp.abs(out - ref)))

    print("KERNEL_OK")
</pallas_src>

<mosaic_0001>
module attributes {stable_mosaic.version = 11 : i64} {
  func.func @_fused_transition_kernel(%arg0: i32, %arg1: memref<1x8x64x8xf32, #tpu.memory_space<vmem>>, %arg2: memref<1x8xf32, #tpu.memory_space<vmem>>, %arg3: memref<1x8xf32, #tpu.memory_space<vmem>>, %arg4: memref<16x64xf32, #tpu.memory_space<vmem>>, %arg5: memref<8x16xf32, #tpu.memory_space<vmem>>, %arg6: memref<1x16xf32, #tpu.memory_space<vmem>>, %arg7: memref<1x48x16xf32, #tpu.memory_space<vmem>>, %arg8: memref<48x8xf32, #tpu.memory_space<vmem>>) attributes {dimension_semantics = [#tpu.dimension_semantics<parallel>], iteration_bounds = array<i64: 2>, scalar_prefetch = 0 : i64, scratch_operands = 1 : i64, tpu.core_type = #tpu.core_type<tc>, window_params = [{transform_indices = @transform_0, window_bounds = array<i64: 1, 8, 64, 8>}, {pipeline_mode = #tpu.pipeline_mode<synchronous>, transform_indices = @transform_1, window_bounds = array<i64: 1, 8>}, {pipeline_mode = #tpu.pipeline_mode<synchronous>, transform_indices = @transform_2, window_bounds = array<i64: 1, 8>}, {pipeline_mode = #tpu.pipeline_mode<synchronous>, transform_indices = @transform_3, window_bounds = array<i64: 16, 64>}, {pipeline_mode = #tpu.pipeline_mode<synchronous>, transform_indices = @transform_4, window_bounds = array<i64: 8, 16>}, {pipeline_mode = #tpu.pipeline_mode<synchronous>, transform_indices = @transform_5, window_bounds = array<i64: 1, 16>}, {transform_indices = @transform_6, window_bounds = array<i64: 1, 48, 16>}]} {
    %c0 = arith.constant 0 : index
    %c0_0 = arith.constant 0 : index
    %0 = vector.load %arg2[%c0, %c0_0] : memref<1x8xf32, #tpu.memory_space<vmem>>, vector<1x8xf32>
    %c0_1 = arith.constant 0 : index
    %c0_2 = arith.constant 0 : index
    %1 = vector.load %arg3[%c0_1, %c0_2] : memref<1x8xf32, #tpu.memory_space<vmem>>, vector<1x8xf32>
    %c0_3 = arith.constant 0 : index
    %c0_4 = arith.constant 0 : index
    %2 = vector.load %arg4[%c0_3, %c0_4] : memref<16x64xf32, #tpu.memory_space<vmem>>, vector<16x64xf32>
    %c0_i32 = arith.constant 0 : i32
    %c3_i32 = arith.constant 3 : i32
    %3 = arith.addi %c0_i32, %c3_i32 : i32
    %c1_i32 = arith.constant 1 : i32
    scf.for %arg9 = %c0_i32 to %3 step %c1_i32  : i32 {
      %c2_i32 = arith.constant 2 : i32
      %13 = arith.muli %c2_i32, %arg9 : i32
      %14 = tpu.assume_multiple %13, 2 : i32
      %c0_15 = arith.constant 0 : index
      %15 = arith.index_cast %14 : i32 to index
      %c0_16 = arith.constant 0 : index
      %c0_17 = arith.constant 0 : index
      %16 = vector.load %arg1[%c0_15, %15, %c0_16, %c0_17] : memref<1x8x64x8xf32, #tpu.memory_space<vmem>>, vector<1x3x64x8xf32>
      %17 = vector.shape_cast %16 : vector<1x3x64x8xf32> to vector<3x64x8xf32>
      %18 = vector.shape_cast %0 : vector<1x8xf32> to vector<1x1x8xf32>
      %19 = vector.broadcast %18 : vector<1x1x8xf32> to vector<3x64x8xf32>
      %20 = arith.mulf %17, %19 : vector<3x64x8xf32>
      %21 = vector.shape_cast %1 : vector<1x8xf32> to vector<1x1x8xf32>
      %22 = vector.broadcast %21 : vector<1x1x8xf32> to vector<3x64x8xf32>
      %23 = arith.addf %20, %22 : vector<3x64x8xf32>
      %cst_18 = arith.constant 0.000000e+00 : f32
      %24 = vector.broadcast %cst_18 : f32 to vector<3x64x8xf32>
      %25 = arith.maximumf %23, %24 : vector<3x64x8xf32>
      %26 = vector.extract_strided_slice %25 {offsets = [0, 0, 0], sizes = [1, 64, 8], strides = [1, 1, 1]} : vector<3x64x8xf32> to vector<1x64x8xf32>
      %27 = vector.shape_cast %26 : vector<1x64x8xf32> to vector<64x8xf32>
      %28 = vector.extract_strided_slice %25 {offsets = [1, 0, 0], sizes = [1, 64, 8], strides = [1, 1, 1]} : vector<3x64x8xf32> to vector<1x64x8xf32>
      %29 = vector.shape_cast %28 : vector<1x64x8xf32> to vector<64x8xf32>
      %30 = arith.addf %27, %29 : vector<64x8xf32>
      %31 = vector.extract_strided_slice %25 {offsets = [2, 0, 0], sizes = [1, 64, 8], strides = [1, 1, 1]} : vector<3x64x8xf32> to vector<1x64x8xf32>
      %32 = vector.shape_cast %31 : vector<1x64x8xf32> to vector<64x8xf32>
      %33 = arith.addf %30, %32 : vector<64x8xf32>
      %c16_i32 = arith.constant 16 : i32
      %34 = arith.muli %arg9, %c16_i32 : i32
      %35 = tpu.assume_multiple %34, 8 : i32
      %cst_19 = arith.constant dense<0.000000e+00> : vector<16x8xf32>
      %36 = tpu.matmul %2, %33, %cst_19 {dimension_numbers = #tpu.dot_dimension_numbers<[1], [0], [0], [1], [0, 0, 1, 1], [], []>} : vector<16x64xf32>, vector<64x8xf32>, vector<16x8xf32> -> vector<16x8xf32>
      %37 = arith.index_cast %35 : i32 to index
      %c0_20 = arith.constant 0 : index
      %38 = vector.load %arg8[%37, %c0_20] : memref<48x8xf32, #tpu.memory_space<vmem>>, vector<16x8xf32>
      tpu.vector_store %arg8[%37, %c0_20], %36 {strides = array<i32>} : memref<48x8xf32, #tpu.memory_space<vmem>>, vector<16x8xf32>,
    }
    %c3_i32_5 = arith.constant 3 : i32
    %c0_6 = arith.constant 0 : index
    %c0_7 = arith.constant 0 : index
    %4 = vector.load %arg8[%c0_6, %c0_7] : memref<48x8xf32, #tpu.memory_space<vmem>>, vector<48x8xf32>
    %c0_8 = arith.constant 0 : index
    %c0_9 = arith.constant 0 : index
    %5 = vector.load %arg5[%c0_8, %c0_9] : memref<8x16xf32, #tpu.memory_space<vmem>>, vector<8x16xf32>
    %cst = arith.constant dense<0.000000e+00> : vector<48x16xf32>
    %6 = tpu.matmul %4, %5, %cst {dimension_numbers = #tpu.dot_dimension_numbers<[1], [0], [0], [1], [0, 0, 1, 1], [], []>} : vector<48x8xf32>, vector<8x16xf32>, vector<48x16xf32> -> vector<48x16xf32>
    %c0_10 = arith.constant 0 : index
    %c0_11 = arith.constant 0 : index
    %7 = vector.load %arg6[%c0_10, %c0_11] : memref<1x16xf32, #tpu.memory_space<vmem>>, vector<1x16xf32>
    %8 = vector.broadcast %7 : vector<1x16xf32> to vector<48x16xf32>
    %9 = arith.addf %6, %8 : vector<48x16xf32>
    %c0_12 = arith.constant 0 : index
    %c0_13 = arith.constant 0 : index
    %c0_14 = arith.constant 0 : index
    %10 = vector.load %arg7[%c0_12, %c0_13, %c0_14] : memref<1x48x16xf32, #tpu.memory_space<vmem>>, vector<1x48x16xf32>
    %11 = vector.shape_cast %10 : vector<1x48x16xf32> to vector<48x16xf32>
    %12 = vector.shape_cast %9 : vector<48x16xf32> to vector<1x48x16xf32>
    tpu.vector_store %arg7[%c0_12, %c0_13, %c0_14], %12 {strides = array<i32>} : memref<1x48x16xf32, #tpu.memory_space<vmem>>, vector<1x48x16xf32>,
    return
  }
  func.func @transform_0(%arg0: i32) -> (i32, i32, i32, i32) {
    %c0_i32 = arith.constant 0 : i32
    %c0_i32_0 = arith.constant 0 : i32
    %c0_i32_1 = arith.constant 0 : i32
    %c0_i32_2 = arith.constant 0 : i32
    return %arg0, %c0_i32, %c0_i32_0, %c0_i32_1 : i32, i32, i32, i32
  }
  func.func @transform_1(%arg0: i32) -> (i32, i32) {
    %c0_i32 = arith.constant 0 : i32
    %c0_i32_0 = arith.constant 0 : i32
    %c0_i32_1 = arith.constant 0 : i32
    return %c0_i32, %c0_i32_0 : i32, i32
  }
  func.func @transform_2(%arg0: i32) -> (i32, i32) {
    %c0_i32 = arith.constant 0 : i32
    %c0_i32_0 = arith.constant 0 : i32
    %c0_i32_1 = arith.constant 0 : i32
    return %c0_i32, %c0_i32_0 : i32, i32
  }
  func.func @transform_3(%arg0: i32) -> (i32, i32) {
    %c0_i32 = arith.constant 0 : i32
    %c0_i32_0 = arith.constant 0 : i32
    %c0_i32_1 = arith.constant 0 : i32
    return %c0_i32, %c0_i32_0 : i32, i32
  }
  func.func @transform_4(%arg0: i32) -> (i32, i32) {
    %c0_i32 = arith.constant 0 : i32
    %c0_i32_0 = arith.constant 0 : i32
    %c0_i32_1 = arith.constant 0 : i32
    return %c0_i32, %c0_i32_0 : i32, i32
  }
  func.func @transform_5(%arg0: i32) -> (i32, i32) {
    %c0_i32 = arith.constant 0 : i32
    %c0_i32_0 = arith.constant 0 : i32
    %c0_i32_1 = arith.constant 0 : i32
    return %c0_i32, %c0_i32_0 : i32, i32
  }
  func.func @transform_6(%arg0: i32) -> (i32, i32, i32) {
    %c0_i32 = arith.constant 0 : i32
    %c0_i32_0 = arith.constant 0 : i32
    %c0_i32_1 = arith.constant 0 : i32
    return %arg0, %c0_i32, %c0_i32_0 : i32, i32, i32
  }
}

</mosaic_0001>

<llo_original>
// kernel: tpu_custom_call.1
$region0: #{tpu_custom_call.1}
  #allocation0 [shape = 'u32[]', space=smem, size = 0x4, offset = 0x4, fixed_abs, tag = 'smem constant byte address 0x4 - core index']
  #allocation1 [shape = 'u32[144,128]{1,0:T(1,128)}', space=vmem, size = 0x12000, scoped, tag = 'internal scratch']
  #allocation2 [shape = 'f32[48,8]{1,0:T(8,128)}', space=vmem, size = 0x6000, scoped, tag = 'scratch operand']
  %s0 = inlined_call_operand.vmem [shape: f32[2,8,64,8], index: 0, kind: input, shape index: {}]
  %s1 = inlined_call_operand.vmem [shape: f32[1,8], index: 1, kind: input, shape index: {}]
  %s2 = inlined_call_operand.vmem [shape: f32[1,8], index: 2, kind: input, shape index: {}]
  %s3 = inlined_call_operand.vmem [shape: f32[16,64], index: 3, kind: input, shape index: {}]
  %s4 = inlined_call_operand.vmem [shape: f32[8,16], index: 4, kind: input, shape index: {}]
  %s5 = inlined_call_operand.vmem [shape: f32[1,16], index: 5, kind: input, shape index: {}]
  %s6 = inlined_call_operand.vmem [shape: f32[2,48,16], index: 6, kind: output, shape index: {}]
  %s7 = sld [smem:[#allocation0]]
  $region64: #{tpu_custom_call.1} parent=0
    _
  %s9 = ssub.s32 1, %s7
  %s10 = scalar_select 0, %s9, %s7
  loop: start=0, step=1, limit=4
  $region2: #{tpu_custom_call.1} parent=0 // loop_pre_header
    _
  $region3: #{tpu_custom_call.1} parent=0 // loop_header
    %s12 = sphi 0, %s16
    %p13 = scmp.ge.s32.totalorder %s12, 4
    %s22 = sphi 0, %s24
    %s25 = sphi 0, %s22
    %s26 = sphi 0, %s25
    %s42 = sphi 0, %s26
    %s46 = sphi 0, %s46
    %s48 = sphi 0, %s46
    %s49 = sphi 0, %s48
    %s63 = sphi 0, %s49
    %s67 = sphi 0, %s67
    %s69 = sphi 0, %s67
    %s70 = sphi 0, %s69
    %s84 = sphi 0, %s70
    %s88 = sphi 0, %s88
    %s90 = sphi 0, %s88
    %s91 = sphi 0, %s90
    %s105 = sphi 0, %s91
    %s109 = sphi 0, %s109
    %s111 = sphi 0, %s109
    %s112 = sphi 0, %s111
    %s126 = sphi 0, %s112
    %s130 = sphi 0, %s130
    %s132 = sphi 0, %s130
    %s133 = sphi 0, %s132
    %s147 = sphi 0, %s133
    %s153 = sphi 0, %s155
    %s156 = sphi 0, %s153
    %s157 = sphi 0, %s156
    %s173 = sphi 0, %s157
  $region4: #{tpu_custom_call.1} parent=0 // loop_header_branch
    %15 = sbr.rel (%p13) target = $region8
  $region5: #{tpu_custom_call.1} parent=0 // loop_body
    %s17 = ssub.s32 %s12, 1
    %s18 = ssub.s32 %s12, 2
    %s19 = sadd.s32 %s12, 1
    %s20 = ssub.s32 %s12, %s19
    %p21 = scmp.eq.s32.totalorder %s20, 0
    %s23 = sadd.s32 %s22, 1
    %s24 = scalar_select %p21, %s22, %s23
    %p27 = pneg %p21
    %p28 = scmp.eq.s32.totalorder %s12, 1
    %p29 = por %p27, %p28
    %p30 = scmp.ne.s32.totalorder %s22, %s25
    %p31 = scmp.eq.s32.totalorder %s12, 0
    %p32 = por %p30, %p31
    %p33 = scmp.ne.s32.totalorder %s22, %s25
    %p34 = scmp.eq.s32.totalorder %s17, 1
    %p35 = por %p33, %p34
    %p36 = scmp.ne.s32.totalorder %s25, %s26
    %p37 = scmp.eq.s32.totalorder %s17, 0
    %p38 = por %p36, %p37
    %p39 = scmp.ne.s32.totalorder %s25, %s26
    %p40 = scmp.eq.s32.totalorder %s18, 1
    %p41 = por %p39, %p40
    %p43 = scmp.ne.s32.totalorder %s26, %s42
    %p44 = scmp.eq.s32.totalorder %s18, 0
    %p45 = por %p43, %p44
    %s47 = sadd.s32 %s46, 1
    %p50 = scmp.eq.s32.totalorder %s12, 1
    %p51 = scmp.ne.s32.totalorder %s46, %s48
    %p52 = scmp.eq.s32.totalorder %s12, 0
    %p53 = por %p51, %p52
    %p54 = scmp.ne.s32.totalorder %s46, %s48
    %p55 = scmp.eq.s32.totalorder %s17, 1
    %p56 = por %p54, %p55
    %p57 = scmp.ne.s32.totalorder %s48, %s49
    %p58 = scmp.eq.s32.totalorder %s17, 0
    %p59 = por %p57, %p58
    %p60 = scmp.ne.s32.totalorder %s48, %s49
    %p61 = scmp.eq.s32.totalorder %s18, 1
    %p62 = por %p60, %p61
    %p64 = scmp.ne.s32.totalorder %s49, %s63
    %p65 = scmp.eq.s32.totalorder %s18, 0
    %p66 = por %p64, %p65
    %s68 = sadd.s32 %s67, 1
    %p71 = scmp.eq.s32.totalorder %s12, 1
    %p72 = scmp.ne.s32.totalorder %s67, %s69
    %p73 = scmp.eq.s32.totalorder %s12, 0
    %p74 = por %p72, %p73
    %p75 = scmp.ne.s32.totalorder %s67, %s69
    %p76 = scmp.eq.s32.totalorder %s17, 1
    %p77 = por %p75, %p76
    %p78 = scmp.ne.s32.totalorder %s69, %s70
    %p79 = scmp.eq.s32.totalorder %s17, 0
    %p80 = por %p78, %p79
    %p81 = scmp.ne.s32.totalorder %s69, %s70
    %p82 = scmp.eq.s32.totalorder %s18, 1
    %p83 = por %p81, %p82
    %p85 = scmp.ne.s32.totalorder %s70, %s84
    %p86 = scmp.eq.s32.totalorder %s18, 0
    %p87 = por %p85, %p86
    %s89 = sadd.s32 %s88, 1
    %p92 = scmp.eq.s32.totalorder %s12, 1
    %p93 = scmp.ne.s32.totalorder %s88, %s90
    %p94 = scmp.eq.s32.totalorder %s12, 0
    %p95 = por %p93, %p94
    %p96 = scmp.ne.s32.totalorder %s88, %s90
    %p97 = scmp.eq.s32.totalorder %s17, 1
    %p98 = por %p96, %p97
    %p99 = scmp.ne.s32.totalorder %s90, %s91
    %p100 = scmp.eq.s32.totalorder %s17, 0
    %p101 = por %p99, %p100
    %p102 = scmp.ne.s32.totalorder %s90, %s91
    %p103 = scmp.eq.s32.totalorder %s18, 1
    %p104 = por %p102, %p103
    %p106 = scmp.ne.s32.totalorder %s91, %s105
    %p107 = scmp.eq.s32.totalorder %s18, 0
    %p108 = por %p106, %p107
    %s110 = sadd.s32 %s109, 1
    %p113 = scmp.eq.s32.totalorder %s12, 1
    %p114 = scmp.ne.s32.totalorder %s109, %s111
    %p115 = scmp.eq.s32.totalorder %s12, 0
    %p116 = por %p114, %p115
    %p117 = scmp.ne.s32.totalorder %s109, %s111
    %p118 = scmp.eq.s32.totalorder %s17, 1
    %p119 = por %p117, %p118
    %p120 = scmp.ne.s32.totalorder %s111, %s112
    %p121 = scmp.eq.s32.totalorder %s17, 0
    %p122 = por %p120, %p121
    %p123 = scmp.ne.s32.totalorder %s111, %s112
    %p124 = scmp.eq.s32.totalorder %s18, 1
    %p125 = por %p123, %p124
    %p127 = scmp.ne.s32.totalorder %s112, %s126
    %p128 = scmp.eq.s32.totalorder %s18, 0
    %p129 = por %p127, %p128
    %s131 = sadd.s32 %s130, 1
    %p134 = scmp.eq.s32.totalorder %s12, 1
    %p135 = scmp.ne.s32.totalorder %s130, %s132
    %p136 = scmp.eq.s32.totalorder %s12, 0
    %p137 = por %p135, %p136
    %p138 = scmp.ne.s32.totalorder %s130, %s132
    %p139 = scmp.eq.s32.totalorder %s17, 1
    %p140 = por %p138, %p139
    %p141 = scmp.ne.s32.totalorder %s132, %s133
    %p142 = scmp.eq.s32.totalorder %s17, 0
    %p143 = por %p141, %p142
    %p144 = scmp.ne.s32.totalorder %s132, %s133
    %p145 = scmp.eq.s32.totalorder %s18, 1
    %p146 = por %p144, %p145
    %p148 = scmp.ne.s32.totalorder %s133, %s147
    %p149 = scmp.eq.s32.totalorder %s18, 0
    %p150 = por %p148, %p149
    %s151 = ssub.s32 %s12, %s19
    %p152 = scmp.eq.s32.totalorder %s151, 0
    %s154 = sadd.s32 %s153, 1
    %s155 = scalar_select %p152, %s153, %s154
    %p158 = pneg %p152
    %p159 = scmp.eq.s32.totalorder %s12, 1
    %p160 = por %p158, %p159
    %p161 = scmp.ne.s32.totalorder %s153, %s156
    %p162 = scmp.eq.s32.totalorder %s12, 0
    %p163 = por %p161, %p162
    %p164 = scmp.ne.s32.totalorder %s153, %s156
    %p165 = scmp.eq.s32.totalorder %s17, 1
    %p166 = por %p164, %p165
    %p167 = scmp.ne.s32.totalorder %s156, %s157
    %p168 = scmp.eq.s32.totalorder %s17, 0
    %p169 = por %p167, %p168
    %p170 = scmp.ne.s32.totalorder %s156, %s157
    %p171 = scmp.eq.s32.totalorder %s18, 1
    %p172 = por %p170, %p171
    %p174 = scmp.ne.s32.totalorder %s157, %s173
    %p175 = scmp.eq.s32.totalorder %s18, 0
    %p176 = por %p174, %p175
    %p177 = scmp.le.s32.totalorder 1, %s12
    %p178 = scmp.lt.s32.totalorder %s12, 3
    %p179 = pnand %p177, %p178
    %p180 = pneg %p179
    // Predicated region
    $region9: #{tpu_custom_call.1} parent=5 // pred_check
      _
    $region10: #{tpu_custom_call.1} parent=5 // pred_check_branch
      %182 = sbr.rel (%p179) target = $region12
    $region11: #{tpu_custom_call.1} parent=5 // pred_region
      %s183 = ssub.s32 %s12, 1
      // Predicated region
      $region13: #{tpu_custom_call.1} parent=11 // pred_check
        %p184 = pneg %p59
      $region14: #{tpu_custom_call.1} parent=11 // pred_check_branch
        %186 = sbr.rel (%p184) target = $region16
      $region15: #{tpu_custom_call.1} parent=11 // pred_region
        _
      $region16: #{tpu_custom_call.1} parent=11 // pred_fallthru
        _
      // Predicated region
      $region17: #{tpu_custom_call.1} parent=11 // pred_check
        %p187 = pneg %p80
      $region18: #{tpu_custom_call.1} parent=11 // pred_check_branch
        %189 = sbr.rel (%p187) target = $region20
      $region19: #{tpu_custom_call.1} parent=11 // pred_region
        _
      $region20: #{tpu_custom_call.1} parent=11 // pred_fallthru
        _
      // Predicated region
      $region21: #{tpu_custom_call.1} parent=11 // pred_check
        %p190 = pneg %p101
      $region22: #{tpu_custom_call.1} parent=11 // pred_check_branch
        %192 = sbr.rel (%p190) target = $region24
      $region23: #{tpu_custom_call.1} parent=11 // pred_region
        _
      $region24: #{tpu_custom_call.1} parent=11 // pred_fallthru
        _
      // Predicated region
      $region25: #{tpu_custom_call.1} parent=11 // pred_check
        %p193 = pneg %p122
      $region26: #{tpu_custom_call.1} parent=11 // pred_check_branch
        %195 = sbr.rel (%p193) target = $region28
      $region27: #{tpu_custom_call.1} parent=11 // pred_region
        _
      $region28: #{tpu_custom_call.1} parent=11 // pred_fallthru
        _
      // Predicated region
      $region29: #{tpu_custom_call.1} parent=11 // pred_check
        %p196 = pneg %p143
      $region30: #{tpu_custom_call.1} parent=11 // pred_check_branch
        %198 = sbr.rel (%p196) target = $region32
      $region31: #{tpu_custom_call.1} parent=11 // pred_region
        _
      $region32: #{tpu_custom_call.1} parent=11 // pred_fallthru
        _
    $region12: #{tpu_custom_call.1} parent=5 // pred_fallthru
      _
    %p199 = scmp.lt.s32.totalorder %s12, 2
    // Predicated region
    $region33: #{tpu_custom_call.1} parent=5 // pred_check
      %p200 = pneg %p199
    $region34: #{tpu_custom_call.1} parent=5 // pred_check_branch
      %202 = sbr.rel (%p200) target = $region36
    $region35: #{tpu_custom_call.1} parent=5 // pred_region
      // Predicated region
      $region37: #{tpu_custom_call.1} parent=35 // pred_check
        %p203 = pneg %p32
      $region38: #{tpu_custom_call.1} parent=35 // pred_check_branch
        %205 = sbr.rel (%p203) target = $region40
      $region39: #{tpu_custom_call.1} parent=35 // pred_region
        %p206 = scmp.lt.s32.totalorder %s12, 1
        %s207 = scalar_select %p206, %s12, 1
        %s208 = smul.addr %s207, 64
        %s209 = smul.addr %s208, 8
        %s210 = scalar_lea.vmem %s0, %s209
      $region40: #{tpu_custom_call.1} parent=35 // pred_fallthru
        _
    $region36: #{tpu_custom_call.1} parent=5 // pred_fallthru
      _
    %p211 = scmp.le.s32.totalorder 1, %s12
    %p212 = scmp.lt.s32.totalorder %s12, 3
    %p213 = pnand %p211, %p212
    %p214 = pneg %p213
    // Predicated region
    $region41: #{tpu_custom_call.1} parent=5 // pred_check
      _
    $region42: #{tpu_custom_call.1} parent=5 // pred_check_branch
      %216 = sbr.rel (%p213) target = $region44
    $region43: #{tpu_custom_call.1} parent=5 // pred_region
      %s217 = ssub.s32 %s12, 1
      %p218 = scmp.lt.s32.totalorder %s17, 1
      %s219 = scalar_select %p218, %s17, 1
      %s220 = smul.addr %s219, 64
      %s221 = smul.addr %s220, 8
      %s222 = scalar_lea.vmem %s0, %s221
      %p223 = pneg %p38
      %p224 = pneg %p35
      %p225 = pneg %p59
      %p226 = pneg %p56
      %p227 = pneg %p80
      %p228 = pneg %p77
      %p229 = pneg %p101
      %p230 = pneg %p98
      %p231 = pneg %p122
      %p232 = pneg %p119
      %p233 = pneg %p143
      %p234 = pneg %p140
      %p235 = pneg %p169
      %p236 = pneg %p166
      %p237 = scmp.lt.s32.totalorder %s17, 1
      %s238 = scalar_select %p237, %s17, 1
      %s239 = smul.addr %s238, 6
      %s240 = smul.addr %s239, 8
      %s241 = scalar_lea.vmem %s6, %s240
      %p242 = scmp.lt.s32.totalorder %s17, 1
      %s243 = scalar_select %p242, %s17, 1
      %s244 = smul.addr %s243, 64
      %s245 = smul.addr %s244, 8
      %s246 = scalar_lea.vmem %s0, %s245
      %p247 = scmp.lt.s32.totalorder %s17, 1
      %s248 = scalar_select %p247, %s17, 1
      %s249 = smul.addr %s248, 6
      %s250 = smul.addr %s249, 8
      %s251 = scalar_lea.vmem %s6, %s250
      %v252 = vld [vmem:[%s1] sm:$0x1]
      %v253 = vld [vmem:[%s2] sm:$0x1]
      %v254 = vld [vmem:[%s3] sm:$0xff]
      %v255 = vld [vmem:[%s3 + $0x8] sm:$0xff]
      loop: start=0, step=1, limit=3
      $region45: #{tpu_custom_call.1} parent=43 // loop_pre_header
        _
      $region46: #{tpu_custom_call.1} parent=43 // loop_header
        %s257 = sphi 0, %s261
        %p258 = scmp.ge.s32.totalorder %s257, 3
      $region47: #{tpu_custom_call.1} parent=43 // loop_header_branch
        %260 = sbr.rel (%p258) target = $region51
      $region48: #{tpu_custom_call.1} parent=43 // loop_body
        %s262 = smul.u32 %s257, 2
        %s263 = smul.u32 %s262, 64
        %s264 = scalar_lea.vmem %s246, %s263
        %v265 = vld [vmem:[%s264] sm:$0xff]
        %v266 = vld [vmem:[%s264 + $0x8] sm:$0xff]
        %v267 = vld [vmem:[%s264 + $0x10] sm:$0xff]
        %v268 = vld [vmem:[%s264 + $0x18] sm:$0xff]
        %v269 = vld [vmem:[%s264 + $0x20] sm:$0xff]
        %v270 = vld [vmem:[%s264 + $0x28] sm:$0xff]
        %v271 = vld [vmem:[%s264 + $0x30] sm:$0xff]
        %v272 = vld [vmem:[%s264 + $0x38] sm:$0xff]
        %v273 = vld [vmem:[%s264 + $0x40] sm:$0xff]
        %v274 = vld [vmem:[%s264 + $0x48] sm:$0xff]
        %v275 = vld [vmem:[%s264 + $0x50] sm:$0xff]
        %v276 = vld [vmem:[%s264 + $0x58] sm:$0xff]
        %v277 = vld [vmem:[%s264 + $0x60] sm:$0xff]
        %v278 = vld [vmem:[%s264 + $0x68] sm:$0xff]
        %v279 = vld [vmem:[%s264 + $0x70] sm:$0xff]
        %v280 = vld [vmem:[%s264 + $0x78] sm:$0xff]
        %v281 = vld [vmem:[%s264 + $0x80] sm:$0xff]
        %v282 = vld [vmem:[%s264 + $0x88] sm:$0xff]
        %v283 = vld [vmem:[%s264 + $0x90] sm:$0xff]
        %v284 = vld [vmem:[%s264 + $0x98] sm:$0xff]
        %v285 = vld [vmem:[%s264 + $0xa0] sm:$0xff]
        %v286 = vld [vmem:[%s264 + $0xa8] sm:$0xff]
        %v287 = vld [vmem:[%s264 + $0xb0] sm:$0xff]
        %v288 = vld [vmem:[%s264 + $0xb8] sm:$0xff]
        %v290 = vlaneseq
        %v291 = vshrl.u32 %v290, 7
        %v292 = vsub.s32 0, %v291
        %v293 = vrot.slane %v252, %v292
        %v295 = vmul.f32 %v265, %v293
        %v296 = vmul.f32 %v266, %v293
        %v297 = vmul.f32 %v267, %v293
        %v298 = vmul.f32 %v268, %v293
        %v299 = vmul.f32 %v269, %v293
        %v300 = vmul.f32 %v270, %v293
        %v301 = vmul.f32 %v271, %v293
        %v302 = vmul.f32 %v272, %v293
        %v303 = vmul.f32 %v273, %v293
        %v304 = vmul.f32 %v274, %v293
        %v305 = vmul.f32 %v275, %v293
        %v306 = vmul.f32 %v276, %v293
        %v307 = vmul.f32 %v277, %v293
        %v308 = vmul.f32 %v278, %v293
        %v309 = vmul.f32 %v279, %v293
        %v310 = vmul.f32 %v280, %v293
        %v311 = vmul.f32 %v281, %v293
        %v312 = vmul.f32 %v282, %v293
        %v313 = vmul.f32 %v283, %v293
        %v314 = vmul.f32 %v284, %v293
        %v315 = vmul.f32 %v285, %v293
        %v316 = vmul.f32 %v286, %v293
        %v317 = vmul.f32 %v287, %v293
        %v318 = vmul.f32 %v288, %v293
        %v320 = vlaneseq
        %v321 = vshrl.u32 %v320, 7
        %v322 = vsub.s32 0, %v321
        %v323 = vrot.slane %v253, %v322
        %v325 = vadd.f32 %v295, %v323
        %v326 = vadd.f32 %v296, %v323
        %v327 = vadd.f32 %v297, %v323
        %v328 = vadd.f32 %v298, %v323
        %v329 = vadd.f32 %v299, %v323
        %v330 = vadd.f32 %v300, %v323
        %v331 = vadd.f32 %v301, %v323
        %v332 = vadd.f32 %v302, %v323
        %v333 = vadd.f32 %v303, %v323
        %v334 = vadd.f32 %v304, %v323
        %v335 = vadd.f32 %v305, %v323
        %v336 = vadd.f32 %v306, %v323
        %v337 = vadd.f32 %v307, %v323
        %v338 = vadd.f32 %v308, %v323
        %v339 = vadd.f32 %v309, %v323
        %v340 = vadd.f32 %v310, %v323
        %v341 = vadd.f32 %v311, %v323
        %v342 = vadd.f32 %v312, %v323
        %v343 = vadd.f32 %v313, %v323
        %v344 = vadd.f32 %v314, %v323
        %v345 = vadd.f32 %v315, %v323
        %v346 = vadd.f32 %v316, %v323
        %v347 = vadd.f32 %v317, %v323
        %v348 = vadd.f32 %v318, %v323
        %v349 = vmax.f32 %v325, 0.0
        %v350 = vmax.f32 %v326, 0.0
        %v351 = vmax.f32 %v327, 0.0
        %v352 = vmax.f32 %v328, 0.0
        %v353 = vmax.f32 %v329, 0.0
        %v354 = vmax.f32 %v330, 0.0
        %v355 = vmax.f32 %v331, 0.0
        %v356 = vmax.f32 %v332, 0.0
        %v357 = vmax.f32 %v333, 0.0
        %v358 = vmax.f32 %v334, 0.0
        %v359 = vmax.f32 %v335, 0.0
        %v360 = vmax.f32 %v336, 0.0
        %v361 = vmax.f32 %v337, 0.0
        %v362 = vmax.f32 %v338, 0.0
        %v363 = vmax.f32 %v339, 0.0
        %v364 = vmax.f32 %v340, 0.0
        %v365 = vmax.f32 %v341, 0.0
        %v366 = vmax.f32 %v342, 0.0
        %v367 = vmax.f32 %v343, 0.0
        %v368 = vmax.f32 %v344, 0.0
        %v369 = vmax.f32 %v345, 0.0
        %v370 = vmax.f32 %v346, 0.0
        %v371 = vmax.f32 %v347, 0.0
        %v372 = vmax.f32 %v348, 0.0
        %v373 = vadd.f32 %v349, %v357
        %v374 = vadd.f32 %v350, %v358
        %v375 = vadd.f32 %v351, %v359
        %v376 = vadd.f32 %v352, %v360
        %v377 = vadd.f32 %v353, %v361
        %v378 = vadd.f32 %v354, %v362
        %v379 = vadd.f32 %v355, %v363
        %v380 = vadd.f32 %v356, %v364
        %v381 = vadd.f32 %v373, %v365
        %v382 = vadd.f32 %v374, %v366
        %v383 = vadd.f32 %v375, %v367
        %v384 = vadd.f32 %v376, %v368
        %v385 = vadd.f32 %v377, %v369
        %v386 = vadd.f32 %v378, %v370
        %v387 = vadd.f32 %v379, %v371
        %v388 = vadd.f32 %v380, %v372
        %s389 = smul.u32 %s257, 16
        %vm390 = vcmask 523264
        %v392 = vsel %vm390, %v254, 0
        %v395 = vsel %vm390, %v255, 0
        %397 = vmatprep.subr.mxu0 0.0
        %398 = vmatpush1.msra.mxu0 %v381
        %399 = vmatprep.subr.mxu0 0.0
        %400 = vmatpush1.msra.mxu0 %v382
        %401 = vmatprep.subr.mxu0 0.0
        %402 = vmatpush1.msra.mxu0 %v383
        %403 = vmatprep.subr.mxu0 0.0
        %404 = vmatpush1.msra.mxu0 %v384
        %405 = vmatprep.subr.mxu0 0.0
        %406 = vmatpush1.msra.mxu0 %v385
        %407 = vmatprep.subr.mxu0 0.0
        %408 = vmatpush1.msra.mxu0 %v386
        %409 = vmatprep.subr.mxu0 0.0
        %410 = vmatpush1.msra.mxu0 %v387
        %411 = vmatprep.subr.mxu0 0.0
        %412 = vmatpush1.msra.mxu0 %v388
        %413 = vmatprep.subr.mxu0 0.0
        %414 = vmatpush1.msra.mxu0 0.0
        %415 = vmatprep.subr.mxu0 0.0
        %416 = vmatpush1.msra.mxu0 0.0
        %417 = vmatprep.subr.mxu0 0.0
        %418 = vmatpush1.msra.mxu0 0.0
        %419 = vmatprep.subr.mxu0 0.0
        %420 = vmatpush1.msra.mxu0 0.0
        %421 = vmatprep.subr.mxu0 0.0
        %422 = vmatpush1.msra.mxu0 0.0
        %423 = vmatprep.subr.mxu0 0.0
        %424 = vmatpush1.msra.mxu0 0.0
        %425 = vmatprep.subr.mxu0 0.0
        %426 = vmatpush1.msra.mxu0 0.0
        %427 = vmatprep.subr.mxu0 0.0
        %428 = vmatpush1.msra.mxu0 0.0
        %429 = vmatprep.subr.mxu0 0.0
        %430 = vmatpush1.msra.mxu0 0.0
        %431 = vmatprep.subr.mxu0 0.0
        %432 = vmatpush1.msra.mxu0 0.0
        %433 = vmatprep.subr.mxu0 0.0
        %434 = vmatpush1.msra.mxu0 0.0
        %435 = vmatprep.subr.mxu0 0.0
        %436 = vmatpush1.msra.mxu0 0.0
        %437 = vmatprep.subr.mxu0 0.0
        %438 = vmatpush1.msra.mxu0 0.0
        %439 = vmatprep.subr.mxu0 0.0
        %440 = vmatpush1.msra.mxu0 0.0
        %441 = vmatprep.subr.mxu0 0.0
        %442 = vmatpush1.msra.mxu0 0.0
        %443 = vmatprep.subr.mxu0 0.0
        %444 = vmatpush1.msra.mxu0 0.0
        %445 = vmatprep.subr.mxu0 0.0
        %446 = vmatpush1.msra.mxu0 0.0
        %447 = vmatprep.subr.mxu0 0.0
        %448 = vmatpush1.msra.mxu0 0.0
        %449 = vmatprep.subr.mxu0 0.0
        %450 = vmatpush1.msra.mxu0 0.0
        %451 = vmatprep.subr.mxu0 0.0
        %452 = vmatpush1.msra.mxu0 0.0
        %453 = vmatprep.subr.mxu0 0.0
        %454 = vmatpush1.msra.mxu0 0.0
        %455 = vmatprep.subr.mxu0 0.0
        %456 = vmatpush1.msra.mxu0 0.0
        %457 = vmatprep.subr.mxu0 0.0
        %458 = vmatpush1.msra.mxu0 0.0
        %459 = vmatprep.subr.mxu0 0.0
        %460 = vmatpush1.msra.mxu0 0.0
        %461 = vmatprep.mubr.f32.mxu0 0.0
        %462 = vmatmul.mubr.f32.gmra.mrb[0].mxu0 %v392
        %v463 = vpop.f32.mrb[0].mxu0
        %v464 = vadd.f32 0.0, %v463
        %v465 = vpop.f32.mrb[0].mxu0
        %466 = vmatprep.mubr.f32.mxu0 0.0
        %467 = vmatmul.mubr.f32.gmra.mrb[0].mxu0 %v395
        %v468 = vpop.f32.mrb[0].mxu0
        %v469 = vadd.f32 0.0, %v468
        %v470 = vpop.f32.mrb[0].mxu0
        %471 = vdwg.mxu0
        %s472 = scalar_lea.vmem [#allocation2], %s389
        %vm473 = vcmask 64512
        %474 = vst.msk [vmem:[%s472] sm:$0xff] %vm473, %v464
        %475 = vst.msk [vmem:[%s472 + $0x8] sm:$0xff] %vm473, %v469
      $region49: #{tpu_custom_call.1} parent=43 // loop_footer
        %s261 = sadd.s32 1, %s257
      $region50: #{tpu_custom_call.1} parent=43 // loop_footer_branch
        %256 = sbr.rel target = $region46
      $region51: #{tpu_custom_call.1} parent=43 // loop_exit
        _
      %v476 = vld [vmem:[#allocation2] sm:$0xff]
      %v477 = vld [vmem:[#allocation2 + $0x8] sm:$0xff]
      %v478 = vld [vmem:[#allocation2 + $0x10] sm:$0xff]
      %v479 = vld [vmem:[#allocation2 + $0x18] sm:$0xff]
      %v480 = vld [vmem:[#allocation2 + $0x20] sm:$0xff]
      %v481 = vld [vmem:[#allocation2 + $0x28] sm:$0xff]
      %v482 = vld [vmem:[%s4] sm:$0xff]
      %v483 = vld [vmem:[%s5] sm:$0x1]
      %v485 = vlaneseq
      %v486 = vshrl.u32 %v485, 7
      %v487 = vsub.s32 0, %v486
      %v488 = vrot.slane %v483, %v487
      %vm490 = vcmask 64512
      %v492 = vsel %vm490, %v476, 0
      %v495 = vsel %vm490, %v477, 0
      %v498 = vsel %vm490, %v478, 0
      %v501 = vsel %vm490, %v479, 0
      %v504 = vsel %vm490, %v480, 0
      %v507 = vsel %vm490, %v481, 0
      %509 = vmatprep.subr.mxu0 0.0
      %510 = vmatpush1.msra.mxu0 %v482
      %511 = vmatprep.subr.mxu0 0.0
      %512 = vmatpush1.msra.mxu0 0.0
      %513 = vmatprep.subr.mxu0 0.0
      %514 = vmatpush1.msra.mxu0 0.0
      %515 = vmatprep.subr.mxu0 0.0
      %516 = vmatpush1.msra.mxu0 0.0
      %517 = vmatprep.subr.mxu0 0.0
      %518 = vmatpush1.msra.mxu0 0.0
      %519 = vmatprep.subr.mxu0 0.0
      %520 = vmatpush1.msra.mxu0 0.0
      %521 = vmatprep.subr.mxu0 0.0
      %522 = vmatpush1.msra.mxu0 0.0
      %523 = vmatprep.subr.mxu0 0.0
      %524 = vmatpush1.msra.mxu0 0.0
      %525 = vmatprep.subr.mxu0 0.0
      %526 = vmatpush1.msra.mxu0 0.0
      %527 = vmatprep.subr.mxu0 0.0
      %528 = vmatpush1.msra.mxu0 0.0
      %529 = vmatprep.subr.mxu0 0.0
      %530 = vmatpush1.msra.mxu0 0.0
      %531 = vmatprep.subr.mxu0 0.0
      %532 = vmatpush1.msra.mxu0 0.0
      %533 = vmatprep.subr.mxu0 0.0
      %534 = vmatpush1.msra.mxu0 0.0
      %535 = vmatprep.subr.mxu0 0.0
      %536 = vmatpush1.msra.mxu0 0.0
      %537 = vmatprep.subr.mxu0 0.0
      %538 = vmatpush1.msra.mxu0 0.0
      %539 = vmatprep.subr.mxu0 0.0
      %540 = vmatpush1.msra.mxu0 0.0
      %541 = vmatprep.subr.mxu0 0.0
      %542 = vmatpush1.msra.mxu0 0.0
      %543 = vmatprep.subr.mxu0 0.0
      %544 = vmatpush1.msra.mxu0 0.0
      %545 = vmatprep.subr.mxu0 0.0
      %546 = vmatpush1.msra.mxu0 0.0
      %547 = vmatprep.subr.mxu0 0.0
      %548 = vmatpush1.msra.mxu0 0.0
      %549 = vmatprep.subr.mxu0 0.0
      %550 = vmatpush1.msra.mxu0 0.0
      %551 = vmatprep.subr.mxu0 0.0
      %552 = vmatpush1.msra.mxu0 0.0
      %553 = vmatprep.subr.mxu0 0.0
      %554 = vmatpush1.msra.mxu0 0.0
      %555 = vmatprep.subr.mxu0 0.0
      %556 = vmatpush1.msra.mxu0 0.0
      %557 = vmatprep.subr.mxu0 0.0
      %558 = vmatpush1.msra.mxu0 0.0
      %559 = vmatprep.subr.mxu0 0.0
      %560 = vmatpush1.msra.mxu0 0.0
      %561 = vmatprep.subr.mxu0 0.0
      %562 = vmatpush1.msra.mxu0 0.0
      %563 = vmatprep.subr.mxu0 0.0
      %564 = vmatpush1.msra.mxu0 0.0
      %565 = vmatprep.subr.mxu0 0.0
      %566 = vmatpush1.msra.mxu0 0.0
      %567 = vmatprep.subr.mxu0 0.0
      %568 = vmatpush1.msra.mxu0 0.0
      %569 = vmatprep.subr.mxu0 0.0
      %570 = vmatpush1.msra.mxu0 0.0
      %571 = vmatprep.subr.mxu0 0.0
      %572 = vmatpush1.msra.mxu0 0.0
      %573 = vmatprep.mubr.f32.mxu0 0.0
      %574 = vmatmul.mubr.f32.gmra.mrb[0].mxu0 %v492
      %v575 = vpop.f32.mrb[0].mxu0
      %v576 = vadd.f32 %v488, %v575
      %v577 = vpop.f32.mrb[0].mxu0
      %578 = vmatprep.mubr.f32.mxu0 0.0
      %579 = vmatmul.mubr.f32.gmra.mrb[0].mxu0 %v495
      %v580 = vpop.f32.mrb[0].mxu0
      %v581 = vadd.f32 %v488, %v580
      %v582 = vpop.f32.mrb[0].mxu0
      %583 = vmatprep.mubr.f32.mxu0 0.0
      %584 = vmatmul.mubr.f32.gmra.mrb[0].mxu0 %v498
      %v585 = vpop.f32.mrb[0].mxu0
      %v586 = vadd.f32 %v488, %v585
      %v587 = vpop.f32.mrb[0].mxu0
      %588 = vmatprep.mubr.f32.mxu0 0.0
      %589 = vmatmul.mubr.f32.gmra.mrb[0].mxu0 %v501
      %v590 = vpop.f32.mrb[0].mxu0
      %v591 = vadd.f32 %v488, %v590
      %v592 = vpop.f32.mrb[0].mxu0
      %593 = vmatprep.mubr.f32.mxu0 0.0
      %594 = vmatmul.mubr.f32.gmra.mrb[0].mxu0 %v504
      %v595 = vpop.f32.mrb[0].mxu0
      %v596 = vadd.f32 %v488, %v595
      %v597 = vpop.f32.mrb[0].mxu0
      %598 = vmatprep.mubr.f32.mxu0 0.0
      %599 = vmatmul.mubr.f32.gmra.mrb[0].mxu0 %v507
      %v600 = vpop.f32.mrb[0].mxu0
      %v601 = vadd.f32 %v488, %v600
      %v602 = vpop.f32.mrb[0].mxu0
      %603 = vdwg.mxu0
      %vm604 = vcmask 130048
      %605 = vst.msk [vmem:[%s251] sm:$0xff] %vm604, %v576
      %606 = vst.msk [vmem:[%s251 + $0x8] sm:$0xff] %vm604, %v581
      %607 = vst.msk [vmem:[%s251 + $0x10] sm:$0xff] %vm604, %v586
      %608 = vst.msk [vmem:[%s251 + $0x18] sm:$0xff] %vm604, %v591
      %609 = vst.msk [vmem:[%s251 + $0x20] sm:$0xff] %vm604, %v596
      %610 = vst.msk [vmem:[%s251 + $0x28] sm:$0xff] %vm604, %v601
      %p611 = scmp.lt.s32.totalorder %s17, 1
      %s612 = scalar_select %p611, %s17, 1
      %s613 = smul.addr %s612, 6
      %s614 = smul.addr %s613, 8
      %s615 = scalar_lea.vmem %s6, %s614
      // Predicated region
      $region52: #{tpu_custom_call.1} parent=43 // pred_check
        %p616 = pneg %p166
      $region53: #{tpu_custom_call.1} parent=43 // pred_check_branch
        %618 = sbr.rel (%p616) target = $region55
      $region54: #{tpu_custom_call.1} parent=43 // pred_region
        _
      $region55: #{tpu_custom_call.1} parent=43 // pred_fallthru
        _
    $region44: #{tpu_custom_call.1} parent=5 // pred_fallthru
      _
    %p619 = scmp.le.s32.totalorder 2, %s12
    // Predicated region
    $region56: #{tpu_custom_call.1} parent=5 // pred_check
      %p620 = pneg %p619
    $region57: #{tpu_custom_call.1} parent=5 // pred_check_branch
      %622 = sbr.rel (%p620) target = $region59
    $region58: #{tpu_custom_call.1} parent=5 // pred_region
      %s623 = ssub.s32 %s12, 2
      // Predicated region
      $region60: #{tpu_custom_call.1} parent=58 // pred_check
        %p624 = pneg %p172
      $region61: #{tpu_custom_call.1} parent=58 // pred_check_branch
        %626 = sbr.rel (%p624) target = $region63
      $region62: #{tpu_custom_call.1} parent=58 // pred_region
        %p627 = scmp.lt.s32.totalorder %s18, 1
        %s628 = scalar_select %p627, %s18, 1
        %s629 = smul.addr %s628, 6
        %s630 = smul.addr %s629, 8
        %s631 = scalar_lea.vmem %s6, %s630
      $region63: #{tpu_custom_call.1} parent=58 // pred_fallthru
        _
    $region59: #{tpu_custom_call.1} parent=5 // pred_fallthru
      _
  $region6: #{tpu_custom_call.1} parent=0 // loop_footer
    %s16 = sadd.s32 1, %s12
  $region7: #{tpu_custom_call.1} parent=0 // loop_footer_branch
    %11 = sbr.rel target = $region3
  $region8: #{tpu_custom_call.1} parent=0 // loop_exit
    _

</llo_original>
